<compile_context>
chip_gen: v7x
topology: tpu7x:2x2x1
jax: 0.10.0
libtpu: 0.0.40
codegen_flags: <defaults>
</compile_context>

<pallas_src>
import functools

import jax
import jax.numpy as jnp
from jax.experimental import pallas as pl
from jax.experimental.pallas import tpu as pltpu

_LANE = 128
_SUBLANE = 8
_MAX_TILE_R = 4096                      # 4096*128*4B = 2 MiB per input per step (f32)
_NCORES = 2                             # leading "parallel" axis: 2 TCs on v7x
_VMEM_LIMIT_BYTES = 48 * 1024 * 1024    # pipeline (~8 MiB) + temps, < v7x 64 MiB


def _round_up(x, m):
    return (x + m - 1) // m * m


def _sep_cos_partial_kernel(u_ref, v_ref, o_ref, *, tile_r, steps_per_core,
                            valid_rows, needs_mask):
    """Accumulates per-(sublane, lane) partial sums into o_ref (4, 8, 128).

    o_ref[0]: sum(u*v)   o_ref[1]: sum(u*u)
    o_ref[2]: sum(v*v)   o_ref[3]: sum((u-v)^2)
    """
    c = pl.program_id(0)          # core / outer-parallel index
    i = pl.program_id(1)          # reduction step within this core

    @pl.when(i == 0)
    def _():
        o_ref[...] = jnp.zeros_like(o_ref)

    u = u_ref[...].astype(jnp.float32)
    v = v_ref[...].astype(jnp.float32)

    r8 = tile_r // _SUBLANE

    def accumulate(ub, vb):
        u3 = ub.reshape(r8, _SUBLANE, _LANE)
        v3 = vb.reshape(r8, _SUBLANE, _LANE)
        d3 = u3 - v3
        # Leading-axis sums are cross-vreg VALU adds (no XLU sublane reduce);
        # each accumulator slice is a full (8, 128) tile (unmasked stores).
        o_ref[0] += jnp.sum(u3 * v3, axis=0)
        o_ref[1] += jnp.sum(u3 * u3, axis=0)
        o_ref[2] += jnp.sum(v3 * v3, axis=0)
        o_ref[3] += jnp.sum(d3 * d3, axis=0)

    if needs_mask:
        block_idx = c * steps_per_core + i
        row_start = block_idx * tile_r
        is_edge = row_start + tile_r > valid_rows   # partial or clamped block

        @pl.when(is_edge)
        def _():
            row_ids = row_start + jax.lax.broadcasted_iota(
                jnp.int32, (tile_r, _LANE), 0)
            valid = row_ids < valid_rows
            # jnp.where, not multiply: out-of-range rows hold unspecified VMEM
            # contents and 0.0 * NaN would poison all four sums.
            accumulate(jnp.where(valid, u, 0.0), jnp.where(valid, v, 0.0))

        @pl.when(jnp.logical_not(is_edge))
        def _():
            accumulate(u, v)      # mask-free hot path for interior blocks
    else:
        accumulate(u, v)


def _partial_sums_pallas(u2, v2, rows):
    """Returns (4,) f32: [sum(u*v), sum(u*u), sum(v*v), sum((u-v)^2)]."""
    tile_r = min(_MAX_TILE_R, _round_up(pl.cdiv(rows, _NCORES), _SUBLANE))
    total_blocks = pl.cdiv(rows, tile_r)
    ncores = min(_NCORES, total_blocks)
    steps_per_core = pl.cdiv(total_blocks, ncores)

    needs_clamp = steps_per_core * ncores != total_blocks
    needs_mask = needs_clamp or (rows % tile_r != 0)

    if needs_clamp:
        def in_map(c, i):
            # Clamp to the last real block; duplicate steps are fully masked
            # in-kernel, so no OOB DMA and no double counting.
            return (jnp.minimum(c * steps_per_core + i, total_blocks - 1), 0)
    else:
        def in_map(c, i):
            return (c * steps_per_core + i, 0)

    kernel = functools.partial(
        _sep_cos_partial_kernel,
        tile_r=tile_r,
        steps_per_core=steps_per_core,
        valid_rows=rows,
        needs_mask=needs_mask,
    )

    partials = pl.pallas_call(
        kernel,
        out_shape=jax.ShapeDtypeStruct((ncores, 4, _SUBLANE, _LANE),
                                       jnp.float32),
        grid_spec=pltpu.PrefetchScalarGridSpec(
            num_scalar_prefetch=0,
            grid=(ncores, steps_per_core),
            in_specs=[
                pl.BlockSpec((tile_r, _LANE), in_map),
                pl.BlockSpec((tile_r, _LANE), in_map),
            ],
            out_specs=pl.BlockSpec((None, 4, _SUBLANE, _LANE),
                                   lambda c, i: (c, 0, 0, 0)),
        ),
        compiler_params=pltpu.CompilerParams(
            dimension_semantics=("parallel", "arbitrary"),
            vmem_limit_bytes=_VMEM_LIMIT_BYTES,
        ),
    )(u2, v2)

    # Tiny finalize reduction (ncores*4*8*128 f32) in plain JAX.
    return jnp.sum(partials, axis=(0, 2, 3))


def separation_cosine_loss(u, v, similarity=0.0, theta=0.8):
    assert u.shape == v.shape, "u and v must have the same shape"
    n = int(u.size)
    assert n > 0

    uf = u.reshape(-1)
    vf = v.reshape(-1)

    rows = n // _LANE
    if rows >= _SUBLANE:
        n_main = rows * _LANE
        # Zero-copy (rows, 128) view when n is 128-aligned; for ragged n the
        # kernel consumes the aligned prefix (tail handled below in JAX).
        um = uf if n_main == n else uf[:n_main]
        vm = vf if n_main == n else vf[:n_main]
        sums = _partial_sums_pallas(um.reshape(rows, _LANE),
                                    vm.reshape(rows, _LANE), rows)
    else:
        # Tiny input (< 1024 elements): not worth a kernel launch.
        n_main = 0
        sums = jnp.zeros((4,), jnp.float32)

    if n_main != n:
        ut = uf[n_main:].astype(jnp.float32)
        vt = vf[n_main:].astype(jnp.float32)
        dt = ut - vt
        sums = sums + jnp.stack([jnp.sum(ut * vt), jnp.sum(ut * ut),
                                 jnp.sum(vt * vt), jnp.sum(dt * dt)])

    dot, uu, vv, sq = sums[0], sums[1], sums[2], sums[3]
    eps = jnp.float32(1e-8)
    # Modern F.cosine_similarity(dim=0, eps=1e-8): each norm clamped to eps.
    cos = dot / (jnp.maximum(jnp.sqrt(uu), eps) * jnp.maximum(jnp.sqrt(vv), eps))
    cos_distance_loss = (1.0 - float(theta)) * jnp.abs(
        1.0 - cos - float(similarity))
    mse = sq / jnp.float32(n)
    return cos_distance_loss + float(theta) * mse


def _reference(u, v, similarity=0.0, theta=0.8):
    """Pure-JAX reference mirroring the PyTorch module."""
    uf = u.reshape(-1).astype(jnp.float32)
    vf = v.reshape(-1).astype(jnp.float32)
    eps = jnp.float32(1e-8)
    un = jnp.maximum(jnp.sqrt(jnp.sum(uf * uf)), eps)
    vn = jnp.maximum(jnp.sqrt(jnp.sum(vf * vf)), eps)
    cos = jnp.dot(uf, vf) / (un * vn)
    cos_loss = (1.0 - theta) * jnp.abs(1.0 - cos - similarity)
    mse = jnp.mean((uf - vf) ** 2)
    return cos_loss + theta * mse


if __name__ == "__main__":
    key = jax.random.PRNGKey(0)
    ku, kv, ka, kb, kc, kd = jax.random.split(key, 6)

    # Main case (matches the module's NCHW usage): aligned, unmasked hot path.
    u = jax.random.normal(ku, (2, 4, 16, 16), dtype=jnp.float32)
    v = jax.random.normal(kv, (2, 4, 16, 16), dtype=jnp.float32)
    loss = separation_cosine_loss(u, v, similarity=0.0, theta=0.8)
    jax.block_until_ready(loss)
    ref = _reference(u, v, similarity=0.0, theta=0.8)
    assert jnp.allclose(loss, ref, atol=1e-5, rtol=1e-5), (loss, ref)

    # 128-aligned but with a partial last block: exercises the masked edge path.
    ua = jax.random.normal(ka, (2, 4, 16, 17), dtype=jnp.float32)
    va = jax.random.normal(kb, (2, 4, 16, 17), dtype=jnp.float32)
    la = separation_cosine_loss(ua, va, similarity=0.1, theta=0.5)
    ra = _reference(ua, va, similarity=0.1, theta=0.5)
    assert jnp.allclose(la, ra, atol=1e-5, rtol=1e-5), (la, ra)

    # Ragged bf16 input: aligned prefix in the kernel, tail in the finalize.
    ub = jax.random.normal(kc, (7, 150), dtype=jnp.bfloat16)
    vb = jax.random.normal(kd, (7, 150), dtype=jnp.bfloat16)
    lb = separation_cosine_loss(ub, vb)
    rb = _reference(ub, vb)
    assert jnp.allclose(lb, rb, atol=1e-4, rtol=1e-3), (lb, rb)

    print("KERNEL_OK")
</pallas_src>

<mosaic_0001>
module attributes {stable_mosaic.version = 11 : i64} {
  func.func @_sep_cos_partial_kernel(%arg0: i32, %arg1: i32, %arg2: memref<8x128xf32, #tpu.memory_space<vmem>>, %arg3: memref<8x128xf32, #tpu.memory_space<vmem>>, %arg4: memref<1x4x8x128xf32, #tpu.memory_space<vmem>>) attributes {dimension_semantics = [#tpu.dimension_semantics<parallel>, #tpu.dimension_semantics<arbitrary>], iteration_bounds = array<i64: 2, 1>, scalar_prefetch = 0 : i64, scratch_operands = 0 : i64, tpu.core_type = #tpu.core_type<tc>, window_params = [{transform_indices = @transform_0, window_bounds = array<i64: 8, 128>}, {transform_indices = @transform_1, window_bounds = array<i64: 8, 128>}, {transform_indices = @transform_2, window_bounds = array<i64: 1, 4, 8, 128>}]} {
    %c0_i32 = arith.constant 0 : i32
    %0 = arith.cmpi eq, %arg1, %c0_i32 : i32
    %1 = arith.extui %0 : i1 to i32
    %c0_i32_0 = arith.constant 0 : i32
    %2 = arith.cmpi ne, %1, %c0_i32_0 : i32
    scf.if %2 {
      %cst_36 = arith.constant 0.000000e+00 : f32
      %40 = vector.broadcast %cst_36 : f32 to vector<4x8x128xf32>
      %c0_37 = arith.constant 0 : index
      %c0_38 = arith.constant 0 : index
      %c0_39 = arith.constant 0 : index
      %c0_40 = arith.constant 0 : index
      %41 = vector.load %arg4[%c0_37, %c0_38, %c0_39, %c0_40] : memref<1x4x8x128xf32, #tpu.memory_space<vmem>>, vector<1x4x8x128xf32>
      %42 = vector.shape_cast %41 : vector<1x4x8x128xf32> to vector<4x8x128xf32>
      %43 = vector.shape_cast %40 : vector<4x8x128xf32> to vector<1x4x8x128xf32>
      tpu.vector_store %arg4[%c0_37, %c0_38, %c0_39, %c0_40], %43 {strides = array<i32>} : memref<1x4x8x128xf32, #tpu.memory_space<vmem>>, vector<1x4x8x128xf32>,
    } else {
    }
    %c0 = arith.constant 0 : index
    %c0_1 = arith.constant 0 : index
    %3 = vector.load %arg2[%c0, %c0_1] : memref<8x128xf32, #tpu.memory_space<vmem>>, vector<8x128xf32>
    %c0_2 = arith.constant 0 : index
    %c0_3 = arith.constant 0 : index
    %4 = vector.load %arg3[%c0_2, %c0_3] : memref<8x128xf32, #tpu.memory_space<vmem>>, vector<8x128xf32>
    %5 = vector.shape_cast %3 : vector<8x128xf32> to vector<1x8x128xf32>
    %6 = vector.shape_cast %4 : vector<8x128xf32> to vector<1x8x128xf32>
    %7 = arith.subf %5, %6 : vector<1x8x128xf32>
    %c0_4 = arith.constant 0 : index
    %c0_5 = arith.constant 0 : index
    %c0_6 = arith.constant 0 : index
    %c0_7 = arith.constant 0 : index
    %8 = vector.load %arg4[%c0_4, %c0_5, %c0_6, %c0_7] : memref<1x4x8x128xf32, #tpu.memory_space<vmem>>, vector<1x1x8x128xf32>
    %9 = vector.shape_cast %8 : vector<1x1x8x128xf32> to vector<8x128xf32>
    %10 = arith.mulf %5, %6 : vector<1x8x128xf32>
    %cst = arith.constant dense<0.000000e+00> : vector<8x128xf32>
    %11 = vector.multi_reduction <add>, %10, %cst [0] : vector<1x8x128xf32> to vector<8x128xf32>
    %12 = arith.addf %9, %11 : vector<8x128xf32>
    %c0_8 = arith.constant 0 : index
    %c0_9 = arith.constant 0 : index
    %c0_10 = arith.constant 0 : index
    %c0_11 = arith.constant 0 : index
    %13 = vector.load %arg4[%c0_8, %c0_9, %c0_10, %c0_11] : memref<1x4x8x128xf32, #tpu.memory_space<vmem>>, vector<1x1x8x128xf32>
    %14 = vector.shape_cast %13 : vector<1x1x8x128xf32> to vector<8x128xf32>
    %15 = vector.shape_cast %12 : vector<8x128xf32> to vector<1x1x8x128xf32>
    tpu.vector_store %arg4[%c0_8, %c0_9, %c0_10, %c0_11], %15 {strides = array<i32>} : memref<1x4x8x128xf32, #tpu.memory_space<vmem>>, vector<1x1x8x128xf32>,
    %c0_12 = arith.constant 0 : index
    %c1 = arith.constant 1 : index
    %c0_13 = arith.constant 0 : index
    %c0_14 = arith.constant 0 : index
    %16 = vector.load %arg4[%c0_12, %c1, %c0_13, %c0_14] : memref<1x4x8x128xf32, #tpu.memory_space<vmem>>, vector<1x1x8x128xf32>
    %17 = vector.shape_cast %16 : vector<1x1x8x128xf32> to vector<8x128xf32>
    %18 = arith.mulf %5, %5 : vector<1x8x128xf32>
    %cst_15 = arith.constant dense<0.000000e+00> : vector<8x128xf32>
    %19 = vector.multi_reduction <add>, %18, %cst_15 [0] : vector<1x8x128xf32> to vector<8x128xf32>
    %20 = arith.addf %17, %19 : vector<8x128xf32>
    %c0_16 = arith.constant 0 : index
    %c1_17 = arith.constant 1 : index
    %c0_18 = arith.constant 0 : index
    %c0_19 = arith.constant 0 : index
    %21 = vector.load %arg4[%c0_16, %c1_17, %c0_18, %c0_19] : memref<1x4x8x128xf32, #tpu.memory_space<vmem>>, vector<1x1x8x128xf32>
    %22 = vector.shape_cast %21 : vector<1x1x8x128xf32> to vector<8x128xf32>
    %23 = vector.shape_cast %20 : vector<8x128xf32> to vector<1x1x8x128xf32>
    tpu.vector_store %arg4[%c0_16, %c1_17, %c0_18, %c0_19], %23 {strides = array<i32>} : memref<1x4x8x128xf32, #tpu.memory_space<vmem>>, vector<1x1x8x128xf32>,
    %c0_20 = arith.constant 0 : index
    %c2 = arith.constant 2 : index
    %c0_21 = arith.constant 0 : index
    %c0_22 = arith.constant 0 : index
    %24 = vector.load %arg4[%c0_20, %c2, %c0_21, %c0_22] : memref<1x4x8x128xf32, #tpu.memory_space<vmem>>, vector<1x1x8x128xf32>
    %25 = vector.shape_cast %24 : vector<1x1x8x128xf32> to vector<8x128xf32>
    %26 = arith.mulf %6, %6 : vector<1x8x128xf32>
    %cst_23 = arith.constant dense<0.000000e+00> : vector<8x128xf32>
    %27 = vector.multi_reduction <add>, %26, %cst_23 [0] : vector<1x8x128xf32> to vector<8x128xf32>
    %28 = arith.addf %25, %27 : vector<8x128xf32>
    %c0_24 = arith.constant 0 : index
    %c2_25 = arith.constant 2 : index
    %c0_26 = arith.constant 0 : index
    %c0_27 = arith.constant 0 : index
    %29 = vector.load %arg4[%c0_24, %c2_25, %c0_26, %c0_27] : memref<1x4x8x128xf32, #tpu.memory_space<vmem>>, vector<1x1x8x128xf32>
    %30 = vector.shape_cast %29 : vector<1x1x8x128xf32> to vector<8x128xf32>
    %31 = vector.shape_cast %28 : vector<8x128xf32> to vector<1x1x8x128xf32>
    tpu.vector_store %arg4[%c0_24, %c2_25, %c0_26, %c0_27], %31 {strides = array<i32>} : memref<1x4x8x128xf32, #tpu.memory_space<vmem>>, vector<1x1x8x128xf32>,
    %c0_28 = arith.constant 0 : index
    %c3 = arith.constant 3 : index
    %c0_29 = arith.constant 0 : index
    %c0_30 = arith.constant 0 : index
    %32 = vector.load %arg4[%c0_28, %c3, %c0_29, %c0_30] : memref<1x4x8x128xf32, #tpu.memory_space<vmem>>, vector<1x1x8x128xf32>
    %33 = vector.shape_cast %32 : vector<1x1x8x128xf32> to vector<8x128xf32>
    %34 = arith.mulf %7, %7 : vector<1x8x128xf32>
    %cst_31 = arith.constant dense<0.000000e+00> : vector<8x128xf32>
    %35 = vector.multi_reduction <add>, %34, %cst_31 [0] : vector<1x8x128xf32> to vector<8x128xf32>
    %36 = arith.addf %33, %35 : vector<8x128xf32>
    %c0_32 = arith.constant 0 : index
    %c3_33 = arith.constant 3 : index
    %c0_34 = arith.constant 0 : index
    %c0_35 = arith.constant 0 : index
    %37 = vector.load %arg4[%c0_32, %c3_33, %c0_34, %c0_35] : memref<1x4x8x128xf32, #tpu.memory_space<vmem>>, vector<1x1x8x128xf32>
    %38 = vector.shape_cast %37 : vector<1x1x8x128xf32> to vector<8x128xf32>
    %39 = vector.shape_cast %36 : vector<8x128xf32> to vector<1x1x8x128xf32>
    tpu.vector_store %arg4[%c0_32, %c3_33, %c0_34, %c0_35], %39 {strides = array<i32>} : memref<1x4x8x128xf32, #tpu.memory_space<vmem>>, vector<1x1x8x128xf32>,
    return
  }
  func.func @transform_0(%arg0: i32, %arg1: i32) -> (i32, i32) {
    %c1_i32 = arith.constant 1 : i32
    %0 = arith.muli %arg0, %c1_i32 : i32
    %1 = arith.addi %0, %arg1 : i32
    %c0_i32 = arith.constant 0 : i32
    %c0_i32_0 = arith.constant 0 : i32
    return %1, %c0_i32 : i32, i32
  }
  func.func @transform_1(%arg0: i32, %arg1: i32) -> (i32, i32) {
    %c1_i32 = arith.constant 1 : i32
    %0 = arith.muli %arg0, %c1_i32 : i32
    %1 = arith.addi %0, %arg1 : i32
    %c0_i32 = arith.constant 0 : i32
    %c0_i32_0 = arith.constant 0 : i32
    return %1, %c0_i32 : i32, i32
  }
  func.func @transform_2(%arg0: i32, %arg1: i32) -> (i32, i32, i32, i32) {
    %c0_i32 = arith.constant 0 : i32
    %c0_i32_0 = arith.constant 0 : i32
    %c0_i32_1 = arith.constant 0 : i32
    %c0_i32_2 = arith.constant 0 : i32
    return %arg0, %c0_i32, %c0_i32_0, %c0_i32_1 : i32, i32, i32, i32
  }
}

</mosaic_0001>

<llo_original>
// kernel: tpu_custom_call.1
$region0: #{tpu_custom_call.1}
  #allocation0 [shape = 'u32[]', space=smem, size = 0x4, offset = 0x4, fixed_abs, tag = 'smem constant byte address 0x4 - core index']
  #allocation1 [shape = 'u32[144,128]{1,0:T(1,128)}', space=vmem, size = 0x12000, scoped, tag = 'internal scratch']
  %s0 = inlined_call_operand.hbm [shape: f32[16,128], index: 0, kind: input, shape index: {}]
  %s1 = inlined_call_operand.hbm [shape: f32[16,128], index: 1, kind: input, shape index: {}]
  %s2 = inlined_call_operand.hbm [shape: f32[2,4,8,128], index: 2, kind: output, shape index: {}]
  %s3 = sld [smem:[#allocation0]]
  $region53: #{tpu_custom_call.1} parent=0
    _
  %s5 = ssub.s32 1, %s3
  %s6 = scalar_select 0, %s5, %s3
  $region1: #{tpu_custom_call.1} parent=0
    #allocation2 [shape = 'u8[8192]{0}', space=vmem, size = 0x2000, scoped, tag = 'input window, operand 0']
    #allocation3 [shape = 's32[2]{0}', space=sflag, size = 0x8, scoped, tag = 'scoped memory for tpu_custom_call.1']
    #allocation4 [shape = 's32[2]{0}', space=sflag, size = 0x8, scoped, tag = 'scoped memory for tpu_custom_call.1']
    #allocation5 [shape = 'u8[8192]{0}', space=vmem, size = 0x2000, scoped, tag = 'input window, operand 1']
    #allocation6 [shape = 's32[2]{0}', space=sflag, size = 0x8, scoped, tag = 'scoped memory for tpu_custom_call.1']
    #allocation7 [shape = 'u8[32768]{0}', space=vmem, size = 0x8000, scoped, tag = 'output window, operand 0']
    %7 = vsyncpa [#allocation3], 0
    %s8 = scalar_lea.sflag [#allocation3], 1
    %9 = vsyncpa %s8, 0
    %10 = vsyncpa [#allocation6], 0
    %s11 = scalar_lea.sflag [#allocation6], 1
    %12 = vsyncpa %s11, 0
    %13 = vsyncpa [#allocation4], 0
    %s14 = scalar_lea.sflag [#allocation4], 1
    %15 = vsyncpa %s14, 0
    loop: start=0, step=1, limit=4
    $region2: #{tpu_custom_call.1} parent=1 // loop_pre_header
      _
    $region3: #{tpu_custom_call.1} parent=1 // loop_header
      %s17 = sphi 0, %s21
      %p18 = scmp.ge.s32.totalorder %s17, 4
      %s24 = sphi 0, %s36
      %s25 = sphi 0, %s32
      %s26 = sphi 0, %s24
      %s27 = sphi 0, %s25
      %s28 = sphi 0, %s26
      %s29 = sphi 0, %s27
      %s41 = sphi 0, %s43
      %s44 = sphi 0, %s41
      %s45 = sphi 0, %s44
      %s61 = sphi 0, %s45
      %s69 = sphi 0, %s71
      %s72 = sphi 0, %s69
      %s73 = sphi 0, %s72
      %s89 = sphi 0, %s73
      %s95 = sphi 0, %s97
      %s98 = sphi 0, %s95
      %s99 = sphi 0, %s98
      %s115 = sphi 0, %s99
    $region4: #{tpu_custom_call.1} parent=1 // loop_header_branch
      %20 = sbr.rel (%p18) target = $region8
    $region5: #{tpu_custom_call.1} parent=1 // loop_body
      %s22 = ssub.s32 %s17, 1
      %s23 = ssub.s32 %s17, 2
      %s30 = sadd.s32 1, %s25
      %p31 = scmp.ge.s32.totalorder %s30, 1
      %s32 = scalar_select %p31, 0, %s30
      %s33 = sadd.s32 1, %s24
      %s34 = scalar_select %p31, %s33, %s24
      %p35 = scmp.ge.s32.totalorder %s34, 2
      %s36 = scalar_select %p35, 0, %s34
      %s37 = sadd.s32 %s24, %s25
      %s38 = sadd.s32 %s36, %s32
      %s39 = ssub.s32 %s37, %s38
      %p40 = scmp.eq.s32.totalorder %s39, 0
      %s42 = sadd.s32 %s41, 1
      %s43 = scalar_select %p40, %s41, %s42
      %p46 = pneg %p40
      %p47 = scmp.eq.s32.totalorder %s17, 1
      %p48 = por %p46, %p47
      %p49 = scmp.ne.s32.totalorder %s41, %s44
      %p50 = scmp.eq.s32.totalorder %s17, 0
      %p51 = por %p49, %p50
      %p52 = scmp.ne.s32.totalorder %s41, %s44
      %p53 = scmp.eq.s32.totalorder %s22, 1
      %p54 = por %p52, %p53
      %p55 = scmp.ne.s32.totalorder %s44, %s45
      %p56 = scmp.eq.s32.totalorder %s22, 0
      %p57 = por %p55, %p56
      %p58 = scmp.ne.s32.totalorder %s44, %s45
      %p59 = scmp.eq.s32.totalorder %s23, 1
      %p60 = por %p58, %p59
      %p62 = scmp.ne.s32.totalorder %s45, %s61
      %p63 = scmp.eq.s32.totalorder %s23, 0
      %p64 = por %p62, %p63
      %s65 = sadd.s32 %s24, %s25
      %s66 = sadd.s32 %s36, %s32
      %s67 = ssub.s32 %s65, %s66
      %p68 = scmp.eq.s32.totalorder %s67, 0
      %s70 = sadd.s32 %s69, 1
      %s71 = scalar_select %p68, %s69, %s70
      %p74 = pneg %p68
      %p75 = scmp.eq.s32.totalorder %s17, 1
      %p76 = por %p74, %p75
      %p77 = scmp.ne.s32.totalorder %s69, %s72
      %p78 = scmp.eq.s32.totalorder %s17, 0
      %p79 = por %p77, %p78
      %p80 = scmp.ne.s32.totalorder %s69, %s72
      %p81 = scmp.eq.s32.totalorder %s22, 1
      %p82 = por %p80, %p81
      %p83 = scmp.ne.s32.totalorder %s72, %s73
      %p84 = scmp.eq.s32.totalorder %s22, 0
      %p85 = por %p83, %p84
      %p86 = scmp.ne.s32.totalorder %s72, %s73
      %p87 = scmp.eq.s32.totalorder %s23, 1
      %p88 = por %p86, %p87
      %p90 = scmp.ne.s32.totalorder %s73, %s89
      %p91 = scmp.eq.s32.totalorder %s23, 0
      %p92 = por %p90, %p91
      %s93 = ssub.s32 %s24, %s36
      %p94 = scmp.eq.s32.totalorder %s93, 0
      %s96 = sadd.s32 %s95, 1
      %s97 = scalar_select %p94, %s95, %s96
      %p100 = pneg %p94
      %p101 = scmp.eq.s32.totalorder %s17, 1
      %p102 = por %p100, %p101
      %p103 = scmp.ne.s32.totalorder %s95, %s98
      %p104 = scmp.eq.s32.totalorder %s17, 0
      %p105 = por %p103, %p104
      %p106 = scmp.ne.s32.totalorder %s95, %s98
      %p107 = scmp.eq.s32.totalorder %s22, 1
      %p108 = por %p106, %p107
      %p109 = scmp.ne.s32.totalorder %s98, %s99
      %p110 = scmp.eq.s32.totalorder %s22, 0
      %p111 = por %p109, %p110
      %p112 = scmp.ne.s32.totalorder %s98, %s99
      %p113 = scmp.eq.s32.totalorder %s23, 1
      %p114 = por %p112, %p113
      %p116 = scmp.ne.s32.totalorder %s99, %s115
      %p117 = scmp.eq.s32.totalorder %s23, 0
      %p118 = por %p116, %p117
      %p119 = scmp.le.s32.totalorder 1, %s17
      %p120 = scmp.lt.s32.totalorder %s17, 3
      %p121 = pnand %p119, %p120
      %p122 = pneg %p121
      // Predicated region
      $region9: #{tpu_custom_call.1} parent=5 // pred_check
        _
      $region10: #{tpu_custom_call.1} parent=5 // pred_check_branch
        %124 = sbr.rel (%p121) target = $region12
      $region11: #{tpu_custom_call.1} parent=5 // pred_region
        %s125 = ssub.s32 %s17, 1
      $region12: #{tpu_custom_call.1} parent=5 // pred_fallthru
        _
      %p126 = scmp.lt.s32.totalorder %s17, 2
      // Predicated region
      $region13: #{tpu_custom_call.1} parent=5 // pred_check
        %p127 = pneg %p126
      $region14: #{tpu_custom_call.1} parent=5 // pred_check_branch
        %129 = sbr.rel (%p127) target = $region16
      $region15: #{tpu_custom_call.1} parent=5 // pred_region
        // Predicated region
        $region17: #{tpu_custom_call.1} parent=15 // pred_check
          %p130 = pneg %p51
        $region18: #{tpu_custom_call.1} parent=15 // pred_check_branch
          %132 = sbr.rel (%p130) target = $region20
        $region19: #{tpu_custom_call.1} parent=15 // pred_region
          %s133 = sand.u32 %s41, 1
          %s134 = scalar_lea.sflag [#allocation3], %s133
          %s135 = sand.u32 %s41, 1
          %s136 = smul.addr %s135, 8
          %s137 = scalar_lea.vmem [#allocation2], %s136
          %s138 = sadd.s32 %s24, %s25
          %s140 = ssub.s32 128, 128
          %141 = vsyncadd %s134, %s140
          %s142 = smul.addr %s138, 128
          %s143 = scalar_lea.hbm %s0, %s142
          %s145 = sshll.u32 %s137, 4
          %s146 = int_to_ptr.vmem [resolvable:$true] %s145
          %148 = dma.hbm_to_vmem [thread:$0]  %s143, 128, %s146, %s134
        $region20: #{tpu_custom_call.1} parent=15 // pred_fallthru
          _
        // Predicated region
        $region21: #{tpu_custom_call.1} parent=15 // pred_check
          %p149 = pneg %p79
        $region22: #{tpu_custom_call.1} parent=15 // pred_check_branch
          %151 = sbr.rel (%p149) target = $region24
        $region23: #{tpu_custom_call.1} parent=15 // pred_region
          %s152 = sand.u32 %s69, 1
          %s153 = scalar_lea.sflag [#allocation6], %s152
          %s154 = sand.u32 %s69, 1
          %s155 = smul.addr %s154, 8
          %s156 = scalar_lea.vmem [#allocation5], %s155
          %s157 = sadd.s32 %s24, %s25
          %s159 = ssub.s32 128, 128
          %160 = vsyncadd %s153, %s159
          %s161 = smul.addr %s157, 128
          %s162 = scalar_lea.hbm %s1, %s161
          %s164 = sshll.u32 %s156, 4
          %s165 = int_to_ptr.vmem [resolvable:$true] %s164
          %167 = dma.hbm_to_vmem [thread:$0]  %s162, 128, %s165, %s153
        $region24: #{tpu_custom_call.1} parent=15 // pred_fallthru
          _
      $region16: #{tpu_custom_call.1} parent=5 // pred_fallthru
        _
      %p168 = scmp.le.s32.totalorder 1, %s17
      %p169 = scmp.lt.s32.totalorder %s17, 3
      %p170 = pnand %p168, %p169
      %p171 = pneg %p170
      // Predicated region
      $region25: #{tpu_custom_call.1} parent=5 // pred_check
        _
      $region26: #{tpu_custom_call.1} parent=5 // pred_check_branch
        %173 = sbr.rel (%p170) target = $region28
      $region27: #{tpu_custom_call.1} parent=5 // pred_region
        %s174 = ssub.s32 %s17, 1
        %s175 = sand.u32 %s44, 1
        %s176 = scalar_lea.sflag [#allocation3], %s175
        %s177 = sand.u32 %s44, 1
        %s178 = smul.addr %s177, 8
        %s179 = scalar_lea.vmem [#allocation2], %s178
        // Predicated region
        $region29: #{tpu_custom_call.1} parent=27 // pred_check
          %p180 = pneg %p57
        $region30: #{tpu_custom_call.1} parent=27 // pred_check_branch
          %182 = sbr.rel (%p180) target = $region32
        $region31: #{tpu_custom_call.1} parent=27 // pred_region
          %183 = dma.done %s176, 128
        $region32: #{tpu_custom_call.1} parent=27 // pred_fallthru
          _
        %s184 = sand.u32 %s72, 1
        %s185 = scalar_lea.sflag [#allocation6], %s184
        %s186 = sand.u32 %s72, 1
        %s187 = smul.addr %s186, 8
        %s188 = scalar_lea.vmem [#allocation5], %s187
        // Predicated region
        $region33: #{tpu_custom_call.1} parent=27 // pred_check
          %p189 = pneg %p85
        $region34: #{tpu_custom_call.1} parent=27 // pred_check_branch
          %191 = sbr.rel (%p189) target = $region36
        $region35: #{tpu_custom_call.1} parent=27 // pred_region
          %192 = dma.done %s185, 128
        $region36: #{tpu_custom_call.1} parent=27 // pred_fallthru
          _
        %s193 = sand.u32 %s44, 1
        %s194 = scalar_lea.sflag [#allocation3], %s193
        %s195 = sand.u32 %s44, 1
        %s196 = smul.addr %s195, 8
        %s197 = scalar_lea.vmem [#allocation2], %s196
        %p198 = pneg %p57
        %p199 = pneg %p54
        %s200 = sand.u32 %s72, 1
        %s201 = scalar_lea.sflag [#allocation6], %s200
        %s202 = sand.u32 %s72, 1
        %s203 = smul.addr %s202, 8
        %s204 = scalar_lea.vmem [#allocation5], %s203
        %p205 = pneg %p85
        %p206 = pneg %p82
        %p207 = pneg %p111
        %p208 = pneg %p108
        %s209 = sand.u32 %s98, 1
        %s210 = scalar_lea.sflag [#allocation4], %s209
        %s211 = sand.u32 %s98, 1
        %s212 = smul.addr %s211, 32
        %s213 = scalar_lea.vmem [#allocation7], %s212
        %s214 = sadd.s32 %s26, %s27
        %s215 = sadd.s32 %s26, %s27
        %p216 = scmp.eq.s32.totalorder %s27, 0
        // Predicated region
        $region37: #{tpu_custom_call.1} parent=27 // pred_check
          %p217 = pneg %p216
        $region38: #{tpu_custom_call.1} parent=27 // pred_check_branch
          %219 = sbr.rel (%p217) target = $region40
        $region39: #{tpu_custom_call.1} parent=27 // pred_region
          %220 = vst [vmem:[%s213] sm:$0xff] 0.0
          %221 = vst [vmem:[%s213 + $0x8] sm:$0xff] 0.0
          %222 = vst [vmem:[%s213 + $0x10] sm:$0xff] 0.0
          %223 = vst [vmem:[%s213 + $0x18] sm:$0xff] 0.0
        $region40: #{tpu_custom_call.1} parent=27 // pred_fallthru
          _
        %v224 = vld [vmem:[%s179] sm:$0xff]
        %v225 = vld [vmem:[%s188] sm:$0xff]
        %v226 = vsub.f32 %v224, %v225
        %v227 = vld [vmem:[%s213] sm:$0xff]
        %v228 = vmul.f32 %v224, %v225
        %v229 = vadd.f32 %v228, 0.0
        %v230 = vadd.f32 %v227, %v229
        %231 = vst [vmem:[%s213] sm:$0xff] %v230
        %s232 = scalar_lea.vmem %s213, 8 [#allocation7]
        %v233 = vld [vmem:[%s232] sm:$0xff]
        %v234 = vmul.f32 %v224, %v224
        %v235 = vadd.f32 %v234, 0.0
        %v236 = vadd.f32 %v233, %v235
        %237 = vst [vmem:[%s232] sm:$0xff] %v236
        %s238 = scalar_lea.vmem %s213, 16 [#allocation7]
        %v239 = vld [vmem:[%s238] sm:$0xff]
        %v240 = vmul.f32 %v225, %v225
        %v241 = vadd.f32 %v240, 0.0
        %v242 = vadd.f32 %v239, %v241
        %243 = vst [vmem:[%s238] sm:$0xff] %v242
        %s244 = scalar_lea.vmem %s213, 24 [#allocation7]
        %v245 = vld [vmem:[%s244] sm:$0xff]
        %v246 = vmul.f32 %v226, %v226
        %v247 = vadd.f32 %v246, 0.0
        %v248 = vadd.f32 %v245, %v247
        %249 = vst [vmem:[%s244] sm:$0xff] %v248
        %s250 = sand.u32 %s98, 1
        %s251 = scalar_lea.sflag [#allocation4], %s250
        %s252 = sand.u32 %s98, 1
        %s253 = smul.addr %s252, 32
        %s254 = scalar_lea.vmem [#allocation7], %s253
        // Predicated region
        $region41: #{tpu_custom_call.1} parent=27 // pred_check
          %p255 = pneg %p108
        $region42: #{tpu_custom_call.1} parent=27 // pred_check_branch
          %257 = sbr.rel (%p255) target = $region44
        $region43: #{tpu_custom_call.1} parent=27 // pred_region
          %s259 = ssub.s32 512, 512
          %260 = vsyncadd %s251, %s259
          %s261 = smul.addr %s26, 4
          %s262 = smul.addr %s261, 128
          %s263 = scalar_lea.hbm %s2, %s262
          %s264 = sshll.u32 %s254, 4
          %s265 = int_to_ptr.vmem [resolvable:$true] %s264
          %270 = dma.vmem_to_hbm [thread:$0]  %s265, 512, %s263, %s251, 128, 128, 8
        $region44: #{tpu_custom_call.1} parent=27 // pred_fallthru
          _
      $region28: #{tpu_custom_call.1} parent=5 // pred_fallthru
        _
      %p271 = scmp.le.s32.totalorder 2, %s17
      // Predicated region
      $region45: #{tpu_custom_call.1} parent=5 // pred_check
        %p272 = pneg %p271
      $region46: #{tpu_custom_call.1} parent=5 // pred_check_branch
        %274 = sbr.rel (%p272) target = $region48
      $region47: #{tpu_custom_call.1} parent=5 // pred_region
        %s275 = ssub.s32 %s17, 2
        // Predicated region
        $region49: #{tpu_custom_call.1} parent=47 // pred_check
          %p276 = pneg %p114
        $region50: #{tpu_custom_call.1} parent=47 // pred_check_branch
          %278 = sbr.rel (%p276) target = $region52
        $region51: #{tpu_custom_call.1} parent=47 // pred_region
          %s279 = sand.u32 %s99, 1
          %s280 = scalar_lea.sflag [#allocation4], %s279
          %s281 = sand.u32 %s99, 1
          %s282 = smul.addr %s281, 32
          %s283 = scalar_lea.vmem [#allocation7], %s282
          %284 = dma.done %s280, 512
        $region52: #{tpu_custom_call.1} parent=47 // pred_fallthru
          _
      $region48: #{tpu_custom_call.1} parent=5 // pred_fallthru
        _
    $region6: #{tpu_custom_call.1} parent=1 // loop_footer
      %s21 = sadd.s32 1, %s17
    $region7: #{tpu_custom_call.1} parent=1 // loop_footer_branch
      %16 = sbr.rel target = $region3
    $region8: #{tpu_custom_call.1} parent=1 // loop_exit
      _
    %285 = vsyncpa [#allocation3], 1
    %s286 = scalar_lea.sflag [#allocation3], 1
    %287 = vsyncpa %s286, 1
    %288 = vsyncpa [#allocation6], 1
    %s289 = scalar_lea.sflag [#allocation6], 1
    %290 = vsyncpa %s289, 1
    %291 = vsyncpa [#allocation4], 1
    %s292 = scalar_lea.sflag [#allocation4], 1
    %293 = vsyncpa %s292, 1

</llo_original>
